<compile_context>
chip_gen: v5e
topology: v5e:2x2
jax: 0.10.0
libtpu: 0.0.40
codegen_flags: <defaults>
</compile_context>

<pallas_src>
import functools

import jax
import jax.numpy as jnp
from jax import lax
from jax.experimental import pallas as pl
from jax.experimental.pallas import tpu as pltpu

HIDDEN = 128  # fixed by the module definition


def _round_up(x, m):
    return (x + m - 1) // m * m


@functools.lru_cache(maxsize=1)
def _vmem_limit_bytes():
    try:
        phys = pltpu.get_tpu_info().vmem_capacity_bytes
    except Exception:
        phys = 64 * 1024 * 1024            # conservative (v7x-sized) fallback
    return min(int(phys * 3 // 4), 100 * 1024 * 1024)


# ------------------------------ Pallas kernel ------------------------------ #

def _mlp_kernel(x_ref, w1_ref, b1_ref, w2_ref, b2_ref, o_ref, acc_ref):
    kk = pl.program_id(1)

    @pl.when(kk == 0)
    def _():
        acc_ref[...] = jnp.zeros_like(acc_ref)

    # fc1 partial product: bf16 operands, f32 MXU accumulation.
    acc_ref[...] += jnp.dot(x_ref[...], w1_ref[...],
                            preferred_element_type=jnp.float32)

    @pl.when(kk == pl.num_programs(1) - 1)
    def _():
        # bias + ReLU epilogue in f32; hidden activation never leaves VMEM.
        h = jnp.maximum(acc_ref[...] + b1_ref[...], 0.0)
        # fc2: bf16 operands, f32 accumulate; lane-dense (padded) output store.
        o = jnp.dot(h.astype(w2_ref.dtype), w2_ref[...],
                    preferred_element_type=jnp.float32)
        o_ref[...] = (o + b2_ref[...]).astype(o_ref.dtype)


# ------------------------- one-time parameter prep -------------------------- #

def prepare_params(params):
    """Transpose to (in, out), cast to bf16, lane-pad fc2 out dim. Call once."""
    w1, b1 = params["w1"], params["b1"]          # (H, K), (H,)  PyTorch layout
    w2, b2 = params["w2"], params["b2"]          # (Nout, H), (Nout,)
    hdim = w1.shape[0]
    nout = w2.shape[0]
    nout_p = _round_up(nout, 128)                # lane-dense output stores

    w1t = jnp.transpose(w1).astype(jnp.bfloat16)             # (K, H)
    w2t = jnp.transpose(w2).astype(jnp.bfloat16)             # (H, Nout)
    b2p = b2.astype(jnp.float32)
    if nout_p != nout:
        w2t = jnp.pad(w2t, ((0, 0), (0, nout_p - nout)))
        b2p = jnp.pad(b2p, (0, nout_p - nout))

    return {
        "w1t": w1t,
        "b1": b1.reshape(1, hdim).astype(jnp.float32),
        "w2t": w2t,
        "b2": b2p.reshape(1, nout_p),
        "nout": nout,
    }


# ------------------------------ tile selection ------------------------------ #

def _choose_tiles(n, k, nout_p, vmem_budget):
    # K tile: only tile K when it is large and 128-aligned so every K block is
    # exact (no garbage columns feeding the reduction).
    if k <= 2048 or k % 128 != 0:
        tk = k   # single full-dim K block
        # TODO(synk): for huge non-128-aligned in_channel, zero-pad K once in
        # prepare_params (and pad x accordingly) to keep blocks lane-aligned.
    else:
        tk = 128
        for cand in range(2048, 127, -128):
            if k % cand == 0:
                tk = cand
                break

    def vmem_bytes(tm):
        # The auto-pipeline double-buffers every input/output block.
        return (2 * tm * tk * 2            # x block   (bf16)
                + 2 * tk * HIDDEN * 2      # w1 block  (bf16)
                + 2 * HIDDEN * 4           # b1        (f32)
                + 2 * HIDDEN * nout_p * 2  # w2        (bf16)
                + 2 * nout_p * 4           # b2        (f32)
                + 2 * tm * nout_p * 4      # out block (f32)
                + tm * HIDDEN * 4)         # f32 accumulator scratch

    tm = 8
    for cand in (1024, 512, 256, 128, 64, 32, 16, 8):
        if vmem_bytes(cand) <= vmem_budget:
            tm = cand
            break
    # Keep >=2 M grid steps when possible so both v7x TensorCores get work
    # (and avoid oversized tiles for small batches); tm stays a multiple of 8.
    while tm > 8 and pl.cdiv(n, tm) < 2:
        tm //= 2
    return tm, tk


# --------------------------------- wrapper ---------------------------------- #

def mlp_forward(x, prepped):
    """x: (N, ...) -> (N, out_channel); prepped from prepare_params()."""
    w1t, b1 = prepped["w1t"], prepped["b1"]
    w2t, b2 = prepped["w2t"], prepped["b2"]
    nout = prepped["nout"]

    n = x.shape[0]
    # x.view(x.size(0), -1); bf16 halves the HBM stream this kernel is bound
    # on (the cast is free when the upstream producer already emits bf16).
    x2 = x.reshape(n, -1).astype(jnp.bfloat16)
    k = x2.shape[1]
    hdim = w1t.shape[1]
    nout_p = w2t.shape[1]

    vmem_limit = _vmem_limit_bytes()
    tm, tk = _choose_tiles(n, k, nout_p, int(vmem_limit * 0.85))
    grid = (pl.cdiv(n, tm), pl.cdiv(k, tk))

    flops = 2 * n * (k * hdim + hdim * nout_p)
    bytes_accessed = (2 * n * k + 2 * k * hdim + 2 * hdim * nout_p
                      + 4 * n * nout_p + 4 * (hdim + nout_p))

    out_p = pl.pallas_call(
        _mlp_kernel,
        out_shape=jax.ShapeDtypeStruct((n, nout_p), jnp.float32),
        grid=grid,
        in_specs=[
            pl.BlockSpec((tm, tk), lambda i, kk: (i, kk)),
            pl.BlockSpec((tk, hdim), lambda i, kk: (kk, 0)),
            pl.BlockSpec((1, hdim), lambda i, kk: (0, 0)),
            pl.BlockSpec((hdim, nout_p), lambda i, kk: (0, 0)),
            pl.BlockSpec((1, nout_p), lambda i, kk: (0, 0)),
        ],
        out_specs=pl.BlockSpec((tm, nout_p), lambda i, kk: (i, 0)),
        scratch_shapes=[pltpu.VMEM((tm, HIDDEN), jnp.float32)],
        compiler_params=pltpu.CompilerParams(
            dimension_semantics=("parallel", "arbitrary"),
            vmem_limit_bytes=vmem_limit),
        cost_estimate=pl.CostEstimate(flops=flops, transcendentals=0,
                                      bytes_accessed=bytes_accessed),
    )(x2, w1t, b1, w2t, b2)

    return out_p[:, :nout]


# ----------------------------- pure-JAX reference --------------------------- #

def mlp_reference(x, params):
    x2 = x.reshape(x.shape[0], -1).astype(jnp.float32)
    h = jax.nn.relu(
        jnp.dot(x2, params["w1"].T, precision=lax.Precision.HIGHEST)
        + params["b1"])
    return (jnp.dot(h, params["w2"].T, precision=lax.Precision.HIGHEST)
            + params["b2"])


# ----------------------------------- main ----------------------------------- #

if __name__ == "__main__":
    key = jax.random.PRNGKey(0)
    k1, k2, k3, k4, kx = jax.random.split(key, 5)

    batch, c, hh, ww = 2, 4, 16, 16          # x.view -> in_channel = 1024
    in_channel = c * hh * ww
    out_channel = 32

    bound1 = 1.0 / float(in_channel) ** 0.5
    bound2 = 1.0 / float(HIDDEN) ** 0.5
    params = {
        "w1": jax.random.uniform(k1, (HIDDEN, in_channel), jnp.float32,
                                 -bound1, bound1),
        "b1": jax.random.uniform(k2, (HIDDEN,), jnp.float32, -bound1, bound1),
        "w2": jax.random.uniform(k3, (out_channel, HIDDEN), jnp.float32,
                                 -bound2, bound2),
        "b2": jax.random.uniform(k4, (out_channel,), jnp.float32,
                                 -bound2, bound2),
    }
    x = jax.random.normal(kx, (batch, c, hh, ww), jnp.float32)

    prepped = prepare_params(params)          # one-time weight preparation
    out = jax.block_until_ready(mlp_forward(x, prepped))
    ref = jax.block_until_ready(mlp_reference(x, params))

    assert out.shape == (batch, out_channel), (out.shape, (batch, out_channel))
    # bf16 operand streaming with f32 accumulation vs an f32 HIGHEST-precision
    # reference: tolerance loosened accordingly.
    assert jnp.allclose(out, ref, atol=2e-2, rtol=2e-2), (
        float(jnp.max(jnp.abs(out - ref))))

    print("KERNEL_OK")
</pallas_src>

<mosaic_0001>
module attributes {stable_mosaic.version = 11 : i64} {
  func.func @_mlp_kernel(%arg0: i32, %arg1: i32, %arg2: memref<8x1024xbf16, #tpu.memory_space<vmem>>, %arg3: memref<1024x128xbf16, #tpu.memory_space<vmem>>, %arg4: memref<1x128xf32, #tpu.memory_space<vmem>>, %arg5: memref<128x128xbf16, #tpu.memory_space<vmem>>, %arg6: memref<1x128xf32, #tpu.memory_space<vmem>>, %arg7: memref<8x128xf32, #tpu.memory_space<vmem>>, %arg8: memref<8x128xf32, #tpu.memory_space<vmem>>) attributes {dimension_semantics = [#tpu.dimension_semantics<parallel>, #tpu.dimension_semantics<arbitrary>], iteration_bounds = array<i64: 1, 1>, scalar_prefetch = 0 : i64, scratch_operands = 1 : i64, tpu.core_type = #tpu.core_type<tc>, window_params = [{transform_indices = @transform_0, window_bounds = array<i64: 8, 1024>}, {transform_indices = @transform_1, window_bounds = array<i64: 1024, 128>}, {pipeline_mode = #tpu.pipeline_mode<synchronous>, transform_indices = @transform_2, window_bounds = array<i64: 1, 128>}, {pipeline_mode = #tpu.pipeline_mode<synchronous>, transform_indices = @transform_3, window_bounds = array<i64: 128, 128>}, {pipeline_mode = #tpu.pipeline_mode<synchronous>, transform_indices = @transform_4, window_bounds = array<i64: 1, 128>}, {transform_indices = @transform_5, window_bounds = array<i64: 8, 128>}]} {
    %c0_i32 = arith.constant 0 : i32
    %0 = arith.cmpi eq, %arg1, %c0_i32 : i32
    %1 = arith.extui %0 : i1 to i32
    %c0_i32_0 = arith.constant 0 : i32
    %2 = arith.cmpi ne, %1, %c0_i32_0 : i32
    scf.if %2 {
      %cst_10 = arith.constant 0.000000e+00 : f32
      %12 = vector.broadcast %cst_10 : f32 to vector<8x128xf32>
      %c0_11 = arith.constant 0 : index
      %c0_12 = arith.constant 0 : index
      %13 = vector.load %arg8[%c0_11, %c0_12] : memref<8x128xf32, #tpu.memory_space<vmem>>, vector<8x128xf32>
      tpu.vector_store %arg8[%c0_11, %c0_12], %12 {strides = array<i32>} : memref<8x128xf32, #tpu.memory_space<vmem>>, vector<8x128xf32>,
    } else {
    }
    %c0 = arith.constant 0 : index
    %c0_1 = arith.constant 0 : index
    %3 = vector.load %arg8[%c0, %c0_1] : memref<8x128xf32, #tpu.memory_space<vmem>>, vector<8x128xf32>
    %c0_2 = arith.constant 0 : index
    %c0_3 = arith.constant 0 : index
    %4 = vector.load %arg2[%c0_2, %c0_3] : memref<8x1024xbf16, #tpu.memory_space<vmem>>, vector<8x1024xbf16>
    %c0_4 = arith.constant 0 : index
    %c0_5 = arith.constant 0 : index
    %5 = vector.load %arg3[%c0_4, %c0_5] : memref<1024x128xbf16, #tpu.memory_space<vmem>>, vector<1024x128xbf16>
    %cst = arith.constant dense<0.000000e+00> : vector<8x128xf32>
    %6 = tpu.matmul %4, %5, %cst {dimension_numbers = #tpu.dot_dimension_numbers<[1], [0], [0], [1], [0, 0, 1, 1], [], []>} : vector<8x1024xbf16>, vector<1024x128xbf16>, vector<8x128xf32> -> vector<8x128xf32>
    %7 = arith.addf %3, %6 : vector<8x128xf32>
    %c0_6 = arith.constant 0 : index
    %c0_7 = arith.constant 0 : index
    %8 = vector.load %arg8[%c0_6, %c0_7] : memref<8x128xf32, #tpu.memory_space<vmem>>, vector<8x128xf32>
    tpu.vector_store %arg8[%c0_6, %c0_7], %7 {strides = array<i32>} : memref<8x128xf32, #tpu.memory_space<vmem>>, vector<8x128xf32>,
    %c0_i32_8 = arith.constant 0 : i32
    %9 = arith.cmpi eq, %arg1, %c0_i32_8 : i32
    %10 = arith.extui %9 : i1 to i32
    %c0_i32_9 = arith.constant 0 : i32
    %11 = arith.cmpi ne, %10, %c0_i32_9 : i32
    scf.if %11 {
      %c0_10 = arith.constant 0 : index
      %c0_11 = arith.constant 0 : index
      %12 = vector.load %arg8[%c0_10, %c0_11] : memref<8x128xf32, #tpu.memory_space<vmem>>, vector<8x128xf32>
      %c0_12 = arith.constant 0 : index
      %c0_13 = arith.constant 0 : index
      %13 = vector.load %arg4[%c0_12, %c0_13] : memref<1x128xf32, #tpu.memory_space<vmem>>, vector<1x128xf32>
      %14 = vector.broadcast %13 : vector<1x128xf32> to vector<8x128xf32>
      %15 = arith.addf %12, %14 : vector<8x128xf32>
      %cst_14 = arith.constant 0.000000e+00 : f32
      %16 = vector.broadcast %cst_14 : f32 to vector<8x128xf32>
      %17 = arith.maximumf %15, %16 : vector<8x128xf32>
      %18 = arith.truncf %17 : vector<8x128xf32> to vector<8x128xbf16>
      %c0_15 = arith.constant 0 : index
      %c0_16 = arith.constant 0 : index
      %19 = vector.load %arg5[%c0_15, %c0_16] : memref<128x128xbf16, #tpu.memory_space<vmem>>, vector<128x128xbf16>
      %cst_17 = arith.constant dense<0.000000e+00> : vector<8x128xf32>
      %20 = tpu.matmul %18, %19, %cst_17 {dimension_numbers = #tpu.dot_dimension_numbers<[1], [0], [0], [1], [0, 0, 1, 1], [], []>} : vector<8x128xbf16>, vector<128x128xbf16>, vector<8x128xf32> -> vector<8x128xf32>
      %c0_18 = arith.constant 0 : index
      %c0_19 = arith.constant 0 : index
      %21 = vector.load %arg6[%c0_18, %c0_19] : memref<1x128xf32, #tpu.memory_space<vmem>>, vector<1x128xf32>
      %22 = vector.broadcast %21 : vector<1x128xf32> to vector<8x128xf32>
      %23 = arith.addf %20, %22 : vector<8x128xf32>
      %c0_20 = arith.constant 0 : index
      %c0_21 = arith.constant 0 : index
      %24 = vector.load %arg7[%c0_20, %c0_21] : memref<8x128xf32, #tpu.memory_space<vmem>>, vector<8x128xf32>
      tpu.vector_store %arg7[%c0_20, %c0_21], %23 {strides = array<i32>} : memref<8x128xf32, #tpu.memory_space<vmem>>, vector<8x128xf32>,
    } else {
    }
    return
  }
  func.func @transform_0(%arg0: i32, %arg1: i32) -> (i32, i32) {
    %c0_i32 = arith.constant 0 : i32
    return %arg0, %arg1 : i32, i32
  }
  func.func @transform_1(%arg0: i32, %arg1: i32) -> (i32, i32) {
    %c0_i32 = arith.constant 0 : i32
    %c0_i32_0 = arith.constant 0 : i32
    return %arg1, %c0_i32 : i32, i32
  }
  func.func @transform_2(%arg0: i32, %arg1: i32) -> (i32, i32) {
    %c0_i32 = arith.constant 0 : i32
    %c0_i32_0 = arith.constant 0 : i32
    %c0_i32_1 = arith.constant 0 : i32
    return %c0_i32, %c0_i32_0 : i32, i32
  }
  func.func @transform_3(%arg0: i32, %arg1: i32) -> (i32, i32) {
    %c0_i32 = arith.constant 0 : i32
    %c0_i32_0 = arith.constant 0 : i32
    %c0_i32_1 = arith.constant 0 : i32
    return %c0_i32, %c0_i32_0 : i32, i32
  }
  func.func @transform_4(%arg0: i32, %arg1: i32) -> (i32, i32) {
    %c0_i32 = arith.constant 0 : i32
    %c0_i32_0 = arith.constant 0 : i32
    %c0_i32_1 = arith.constant 0 : i32
    return %c0_i32, %c0_i32_0 : i32, i32
  }
  func.func @transform_5(%arg0: i32, %arg1: i32) -> (i32, i32) {
    %c0_i32 = arith.constant 0 : i32
    %c0_i32_0 = arith.constant 0 : i32
    return %arg0, %c0_i32 : i32, i32
  }
}

</mosaic_0001>

<llo_original>
// kernel: tpu_custom_call.1
$region0: #{tpu_custom_call.1}
  #allocation0 [shape = 'u32[]', space=smem, size = 0x4, offset = 0x4, fixed_abs, tag = 'smem constant byte address 0x4 - core index']
  #allocation1 [shape = 'u32[72,128]{1,0:T(1,128)}', space=vmem, size = 0x9000, scoped, tag = 'internal scratch']
  #allocation2 [shape = 'f32[8,128]{1,0:T(8,128)}', space=vmem, size = 0x1000, scoped, tag = 'scratch operand']
  %s0 = inlined_call_operand.hbm [shape: bf16[2,1024], index: 0, kind: input, shape index: {}]
  %s1 = inlined_call_operand.hbm [shape: bf16[1024,128], index: 1, kind: input, shape index: {}]
  %s2 = inlined_call_operand.vmem [shape: f32[1,128], index: 2, kind: input, shape index: {}]
  %s3 = inlined_call_operand.hbm [shape: bf16[128,128], index: 3, kind: input, shape index: {}]
  %s4 = inlined_call_operand.vmem [shape: f32[1,128], index: 4, kind: input, shape index: {}]
  %s5 = inlined_call_operand.hbm [shape: f32[2,128], index: 5, kind: output, shape index: {}]
  %s6 = sld [smem:[#allocation0]]
  $region50: #{tpu_custom_call.1} parent=0
    _
  %s8 = ssub.s32 1, %s6
  %s9 = scalar_select 0, %s8, %s6
  $region1: #{tpu_custom_call.1} parent=0
    #allocation3 [shape = 'u8[16384]{0}', space=vmem, size = 0x4000, scoped, tag = 'input window, operand 0, single buffered']
    #allocation4 [shape = 's32[1]{0}', space=sflag, size = 0x4, scoped, tag = 'scoped memory for tpu_custom_call.1']
    #allocation5 [shape = 's32[1]{0}', space=sflag, size = 0x4, scoped, tag = 'scoped memory for tpu_custom_call.1']
    #allocation6 [shape = 'u8[262144]{0}', space=vmem, size = 0x40000, scoped, tag = 'input window, operand 1, single buffered']
    #allocation7 [shape = 's32[1]{0}', space=sflag, size = 0x4, scoped, tag = 'scoped memory for tpu_custom_call.1']
    #allocation8 [shape = 'u8[32768]{0}', space=vmem, size = 0x8000, scoped, tag = 'input window, operand 3, single buffered']
    #allocation9 [shape = 'u8[4096]{0}', space=vmem, size = 0x1000, scoped, tag = 'output window, operand 0, single buffered']
    %10 = vsyncpa [#allocation4], 0
    %11 = vsyncpa [#allocation7], 0
    %12 = vsyncpa [#allocation5], 0
    // Predicated region
    $region2: #{tpu_custom_call.1} parent=1 // pred_check
      _
    $region3: #{tpu_custom_call.1} parent=1 // pred_check_branch
      %14 = sbr.rel (0) target = $region5
    $region4: #{tpu_custom_call.1} parent=1 // pred_region
      %16 = vsyncadd [#allocation4], 384
      %s17 = sshll.u32 %s0, 4
      %s18 = int_to_ptr.hbm [resolvable:$true] %s17
      %s19 = sshll.u32 [#allocation3], 4
      %s20 = int_to_ptr.vmem [resolvable:$true] %s19
      %25 = dma.hbm_to_vmem [thread:$0]  %s18, 128, %s20, [#allocation4], 128, 128, 8
    $region5: #{tpu_custom_call.1} parent=1 // pred_fallthru
      _
    // Predicated region
    $region6: #{tpu_custom_call.1} parent=1 // pred_check
      _
    $region7: #{tpu_custom_call.1} parent=1 // pred_check_branch
      %27 = sbr.rel (0) target = $region9
    $region8: #{tpu_custom_call.1} parent=1 // pred_region
      %29 = vsyncadd [#allocation7], 0
      %s30 = sshll.u32 %s1, 4
      %s31 = int_to_ptr.hbm [resolvable:$true] %s30
      %s32 = sshll.u32 [#allocation6], 4
      %s33 = int_to_ptr.vmem [resolvable:$true] %s32
      %38 = dma.hbm_to_vmem [thread:$0]  %s31, 8192, %s33, [#allocation7], 64, 64, 4
    $region9: #{tpu_custom_call.1} parent=1 // pred_fallthru
      _
    // Predicated region
    $region10: #{tpu_custom_call.1} parent=1 // pred_check
      _
    $region11: #{tpu_custom_call.1} parent=1 // pred_check_branch
      %40 = sbr.rel (0) target = $region13
    $region12: #{tpu_custom_call.1} parent=1 // pred_region
      _
    $region13: #{tpu_custom_call.1} parent=1 // pred_fallthru
      _
    // Predicated region
    $region14: #{tpu_custom_call.1} parent=1 // pred_check
      _
    $region15: #{tpu_custom_call.1} parent=1 // pred_check_branch
      %42 = sbr.rel (0) target = $region17
    $region16: #{tpu_custom_call.1} parent=1 // pred_region
      %44 = vsyncadd [#allocation7], 0
      %s45 = sshll.u32 %s3, 4
      %s46 = int_to_ptr.hbm [resolvable:$true] %s45
      %s47 = sshll.u32 [#allocation8], 4
      %s48 = int_to_ptr.vmem [resolvable:$true] %s47
      %53 = dma.hbm_to_vmem [thread:$0]  %s46, 1024, %s48, [#allocation7], 64, 64, 4
    $region17: #{tpu_custom_call.1} parent=1 // pred_fallthru
      _
    // Predicated region
    $region18: #{tpu_custom_call.1} parent=1 // pred_check
      _
    $region19: #{tpu_custom_call.1} parent=1 // pred_check_branch
      %55 = sbr.rel (0) target = $region21
    $region20: #{tpu_custom_call.1} parent=1 // pred_region
      _
    $region21: #{tpu_custom_call.1} parent=1 // pred_fallthru
      _
    // Predicated region
    $region22: #{tpu_custom_call.1} parent=1 // pred_check
      _
    $region23: #{tpu_custom_call.1} parent=1 // pred_check_branch
      %57 = sbr.rel (0) target = $region25
    $region24: #{tpu_custom_call.1} parent=1 // pred_region
      %59 = dma.done [#allocation4], 512
    $region25: #{tpu_custom_call.1} parent=1 // pred_fallthru
      _
    // Predicated region
    $region26: #{tpu_custom_call.1} parent=1 // pred_check
      _
    $region27: #{tpu_custom_call.1} parent=1 // pred_check_branch
      %61 = sbr.rel (0) target = $region29
    $region28: #{tpu_custom_call.1} parent=1 // pred_region
      %63 = dma.done [#allocation7], 8192
    $region29: #{tpu_custom_call.1} parent=1 // pred_fallthru
      _
    // Predicated region
    $region30: #{tpu_custom_call.1} parent=1 // pred_check
      _
    $region31: #{tpu_custom_call.1} parent=1 // pred_check_branch
      %65 = sbr.rel (0) target = $region33
    $region32: #{tpu_custom_call.1} parent=1 // pred_region
      %67 = dma.done [#allocation7], 1024
    $region33: #{tpu_custom_call.1} parent=1 // pred_fallthru
      _
    %p68 = scmp.eq.s32.totalorder 0, 0
    // Predicated region
    $region34: #{tpu_custom_call.1} parent=1 // pred_check
      %p69 = pneg %p68
    $region35: #{tpu_custom_call.1} parent=1 // pred_check_branch
      %71 = sbr.rel (%p69) target = $region37
    $region36: #{tpu_custom_call.1} parent=1 // pred_region
      %72 = vst [vmem:[#allocation2] sm:$0xff] 0.0
    $region37: #{tpu_custom_call.1} parent=1 // pred_fallthru
      _
    %v73 = vld [vmem:[#allocation2] sm:$0xff]
    %v74 = vld [vmem:[#allocation3] sm:$0xff]
    %v75 = vld [vmem:[#allocation3 + $0x8] sm:$0xff]
    %v76 = vld [vmem:[#allocation3 + $0x10] sm:$0xff]
    %v77 = vld [vmem:[#allocation3 + $0x18] sm:$0xff]
    %v78 = vld [vmem:[#allocation6] sm:$0xf]
    %v79 = vld [vmem:[#allocation6 + $0x4] sm:$0xf]
    %v80 = vld [vmem:[#allocation6 + $0x8] sm:$0xf]
    %v81 = vld [vmem:[#allocation6 + $0xc] sm:$0xf]
    %v82 = vld [vmem:[#allocation6 + $0x10] sm:$0xf]
    %v83 = vld [vmem:[#allocation6 + $0x14] sm:$0xf]
    %v84 = vld [vmem:[#allocation6 + $0x18] sm:$0xf]
    %v85 = vld [vmem:[#allocation6 + $0x1c] sm:$0xf]
    %v86 = vld [vmem:[#allocation6 + $0x20] sm:$0xf]
    %v87 = vld [vmem:[#allocation6 + $0x24] sm:$0xf]
    %v88 = vld [vmem:[#allocation6 + $0x28] sm:$0xf]
    %v89 = vld [vmem:[#allocation6 + $0x2c] sm:$0xf]
    %v90 = vld [vmem:[#allocation6 + $0x30] sm:$0xf]
    %v91 = vld [vmem:[#allocation6 + $0x34] sm:$0xf]
    %v92 = vld [vmem:[#allocation6 + $0x38] sm:$0xf]
    %v93 = vld [vmem:[#allocation6 + $0x3c] sm:$0xf]
    %v94 = vld [vmem:[#allocation6 + $0x40] sm:$0xf]
    %v95 = vld [vmem:[#allocation6 + $0x44] sm:$0xf]
    %v96 = vld [vmem:[#allocation6 + $0x48] sm:$0xf]
    %v97 = vld [vmem:[#allocation6 + $0x4c] sm:$0xf]
    %v98 = vld [vmem:[#allocation6 + $0x50] sm:$0xf]
    %v99 = vld [vmem:[#allocation6 + $0x54] sm:$0xf]
    %v100 = vld [vmem:[#allocation6 + $0x58] sm:$0xf]
    %v101 = vld [vmem:[#allocation6 + $0x5c] sm:$0xf]
    %v102 = vld [vmem:[#allocation6 + $0x60] sm:$0xf]
    %v103 = vld [vmem:[#allocation6 + $0x64] sm:$0xf]
    %v104 = vld [vmem:[#allocation6 + $0x68] sm:$0xf]
    %v105 = vld [vmem:[#allocation6 + $0x6c] sm:$0xf]
    %v106 = vld [vmem:[#allocation6 + $0x70] sm:$0xf]
    %v107 = vld [vmem:[#allocation6 + $0x74] sm:$0xf]
    %v108 = vld [vmem:[#allocation6 + $0x78] sm:$0xf]
    %v109 = vld [vmem:[#allocation6 + $0x7c] sm:$0xf]
    %v110 = vld [vmem:[#allocation6 + $0x80] sm:$0xf]
    %v111 = vld [vmem:[#allocation6 + $0x84] sm:$0xf]
    %v112 = vld [vmem:[#allocation6 + $0x88] sm:$0xf]
    %v113 = vld [vmem:[#allocation6 + $0x8c] sm:$0xf]
    %v114 = vld [vmem:[#allocation6 + $0x90] sm:$0xf]
    %v115 = vld [vmem:[#allocation6 + $0x94] sm:$0xf]
    %v116 = vld [vmem:[#allocation6 + $0x98] sm:$0xf]
    %v117 = vld [vmem:[#allocation6 + $0x9c] sm:$0xf]
    %v118 = vld [vmem:[#allocation6 + $0xa0] sm:$0xf]
    %v119 = vld [vmem:[#allocation6 + $0xa4] sm:$0xf]
    %v120 = vld [vmem:[#allocation6 + $0xa8] sm:$0xf]
    %v121 = vld [vmem:[#allocation6 + $0xac] sm:$0xf]
    %v122 = vld [vmem:[#allocation6 + $0xb0] sm:$0xf]
    %v123 = vld [vmem:[#allocation6 + $0xb4] sm:$0xf]
    %v124 = vld [vmem:[#allocation6 + $0xb8] sm:$0xf]
    %v125 = vld [vmem:[#allocation6 + $0xbc] sm:$0xf]
    %v126 = vld [vmem:[#allocation6 + $0xc0] sm:$0xf]
    %v127 = vld [vmem:[#allocation6 + $0xc4] sm:$0xf]
    %v128 = vld [vmem:[#allocation6 + $0xc8] sm:$0xf]
    %v129 = vld [vmem:[#allocation6 + $0xcc] sm:$0xf]
    %v130 = vld [vmem:[#allocation6 + $0xd0] sm:$0xf]
    %v131 = vld [vmem:[#allocation6 + $0xd4] sm:$0xf]
    %v132 = vld [vmem:[#allocation6 + $0xd8] sm:$0xf]
    %v133 = vld [vmem:[#allocation6 + $0xdc] sm:$0xf]
    %v134 = vld [vmem:[#allocation6 + $0xe0] sm:$0xf]
    %v135 = vld [vmem:[#allocation6 + $0xe4] sm:$0xf]
    %v136 = vld [vmem:[#allocation6 + $0xe8] sm:$0xf]
    %v137 = vld [vmem:[#allocation6 + $0xec] sm:$0xf]
    %v138 = vld [vmem:[#allocation6 + $0xf0] sm:$0xf]
    %v139 = vld [vmem:[#allocation6 + $0xf4] sm:$0xf]
    %v140 = vld [vmem:[#allocation6 + $0xf8] sm:$0xf]
    %v141 = vld [vmem:[#allocation6 + $0xfc] sm:$0xf]
    %v142 = vld [vmem:[#allocation6 + $0x100] sm:$0xf]
    %v143 = vld [vmem:[#allocation6 + $0x104] sm:$0xf]
    %v144 = vld [vmem:[#allocation6 + $0x108] sm:$0xf]
    %v145 = vld [vmem:[#allocation6 + $0x10c] sm:$0xf]
    %v146 = vld [vmem:[#allocation6 + $0x110] sm:$0xf]
    %v147 = vld [vmem:[#allocation6 + $0x114] sm:$0xf]
    %v148 = vld [vmem:[#allocation6 + $0x118] sm:$0xf]
    %v149 = vld [vmem:[#allocation6 + $0x11c] sm:$0xf]
    %v150 = vld [vmem:[#allocation6 + $0x120] sm:$0xf]
    %v151 = vld [vmem:[#allocation6 + $0x124] sm:$0xf]
    %v152 = vld [vmem:[#allocation6 + $0x128] sm:$0xf]
    %v153 = vld [vmem:[#allocation6 + $0x12c] sm:$0xf]
    %v154 = vld [vmem:[#allocation6 + $0x130] sm:$0xf]
    %v155 = vld [vmem:[#allocation6 + $0x134] sm:$0xf]
    %v156 = vld [vmem:[#allocation6 + $0x138] sm:$0xf]
    %v157 = vld [vmem:[#allocation6 + $0x13c] sm:$0xf]
    %v158 = vld [vmem:[#allocation6 + $0x140] sm:$0xf]
    %v159 = vld [vmem:[#allocation6 + $0x144] sm:$0xf]
    %v160 = vld [vmem:[#allocation6 + $0x148] sm:$0xf]
    %v161 = vld [vmem:[#allocation6 + $0x14c] sm:$0xf]
    %v162 = vld [vmem:[#allocation6 + $0x150] sm:$0xf]
    %v163 = vld [vmem:[#allocation6 + $0x154] sm:$0xf]
    %v164 = vld [vmem:[#allocation6 + $0x158] sm:$0xf]
    %v165 = vld [vmem:[#allocation6 + $0x15c] sm:$0xf]
    %v166 = vld [vmem:[#allocation6 + $0x160] sm:$0xf]
    %v167 = vld [vmem:[#allocation6 + $0x164] sm:$0xf]
    %v168 = vld [vmem:[#allocation6 + $0x168] sm:$0xf]
    %v169 = vld [vmem:[#allocation6 + $0x16c] sm:$0xf]
    %v170 = vld [vmem:[#allocation6 + $0x170] sm:$0xf]
    %v171 = vld [vmem:[#allocation6 + $0x174] sm:$0xf]
    %v172 = vld [vmem:[#allocation6 + $0x178] sm:$0xf]
    %v173 = vld [vmem:[#allocation6 + $0x17c] sm:$0xf]
    %v174 = vld [vmem:[#allocation6 + $0x180] sm:$0xf]
    %v175 = vld [vmem:[#allocation6 + $0x184] sm:$0xf]
    %v176 = vld [vmem:[#allocation6 + $0x188] sm:$0xf]
    %v177 = vld [vmem:[#allocation6 + $0x18c] sm:$0xf]
    %v178 = vld [vmem:[#allocation6 + $0x190] sm:$0xf]
    %v179 = vld [vmem:[#allocation6 + $0x194] sm:$0xf]
    %v180 = vld [vmem:[#allocation6 + $0x198] sm:$0xf]
    %v181 = vld [vmem:[#allocation6 + $0x19c] sm:$0xf]
    %v182 = vld [vmem:[#allocation6 + $0x1a0] sm:$0xf]
    %v183 = vld [vmem:[#allocation6 + $0x1a4] sm:$0xf]
    %v184 = vld [vmem:[#allocation6 + $0x1a8] sm:$0xf]
    %v185 = vld [vmem:[#allocation6 + $0x1ac] sm:$0xf]
    %v186 = vld [vmem:[#allocation6 + $0x1b0] sm:$0xf]
    %v187 = vld [vmem:[#allocation6 + $0x1b4] sm:$0xf]
    %v188 = vld [vmem:[#allocation6 + $0x1b8] sm:$0xf]
    %v189 = vld [vmem:[#allocation6 + $0x1bc] sm:$0xf]
    %v190 = vld [vmem:[#allocation6 + $0x1c0] sm:$0xf]
    %v191 = vld [vmem:[#allocation6 + $0x1c4] sm:$0xf]
    %v192 = vld [vmem:[#allocation6 + $0x1c8] sm:$0xf]
    %v193 = vld [vmem:[#allocation6 + $0x1cc] sm:$0xf]
    %v194 = vld [vmem:[#allocation6 + $0x1d0] sm:$0xf]
    %v195 = vld [vmem:[#allocation6 + $0x1d4] sm:$0xf]
    %v196 = vld [vmem:[#allocation6 + $0x1d8] sm:$0xf]
    %v197 = vld [vmem:[#allocation6 + $0x1dc] sm:$0xf]
    %v198 = vld [vmem:[#allocation6 + $0x1e0] sm:$0xf]
    %v199 = vld [vmem:[#allocation6 + $0x1e4] sm:$0xf]
    %v200 = vld [vmem:[#allocation6 + $0x1e8] sm:$0xf]
    %v201 = vld [vmem:[#allocation6 + $0x1ec] sm:$0xf]
    %v202 = vld [vmem:[#allocation6 + $0x1f0] sm:$0xf]
    %v203 = vld [vmem:[#allocation6 + $0x1f4] sm:$0xf]
    %v204 = vld [vmem:[#allocation6 + $0x1f8] sm:$0xf]
    %v205 = vld [vmem:[#allocation6 + $0x1fc] sm:$0xf]
    %207 = vst [vmem:[#allocation1] ss:$9 sm:$0xff] %v74
    %s209 = scalar_lea.vmem [#allocation1], 1
    %210 = vst [vmem:[%s209] ss:$9 sm:$0xff] %v75
    %s212 = scalar_lea.vmem [#allocation1], 2
    %213 = vst [vmem:[%s212] ss:$9 sm:$0xff] %v76
    %s215 = scalar_lea.vmem [#allocation1], 3
    %216 = vst [vmem:[%s215] ss:$9 sm:$0xff] %v77
    %v217 = vld [vmem:[#allocation1] sm:$0xff]
    %v218 = vld [vmem:[#allocation1 + $0x9] sm:$0xff]
    %v219 = vld [vmem:[#allocation1 + $0x12] sm:$0xff]
    %v220 = vld [vmem:[#allocation1 + $0x1b] sm:$0xff]
    %v221 = vld [vmem:[#allocation1 + $0x24] sm:$0xff]
    %v222 = vld [vmem:[#allocation1 + $0x2d] sm:$0xff]
    %v223 = vld [vmem:[#allocation1 + $0x36] sm:$0xff]
    %v224 = vld [vmem:[#allocation1 + $0x3f] sm:$0xff]
    %v361 = vunpack.c.l.b16 %v78
    %v362 = vunpack.c.l.b16 %v79
    %v363 = vunpack.c.l.b16 %v80
    %v364 = vunpack.c.l.b16 %v81
    %v365 = vunpack.c.l.b16 %v82
    %v366 = vunpack.c.l.b16 %v83
    %v367 = vunpack.c.l.b16 %v84
    %v368 = vunpack.c.l.b16 %v85
    %v369 = vunpack.c.l.b16 %v86
    %v370 = vunpack.c.l.b16 %v87
    %v371 = vunpack.c.l.b16 %v88
    %v372 = vunpack.c.l.b16 %v89
    %v373 = vunpack.c.l.b16 %v90
    %v374 = vunpack.c.l.b16 %v91
    %v375 = vunpack.c.l.b16 %v92
    %v376 = vunpack.c.l.b16 %v93
    %v377 = vunpack.c.l.b16 %v94
    %v378 = vunpack.c.l.b16 %v95
    %v379 = vunpack.c.l.b16 %v96
    %v380 = vunpack.c.l.b16 %v97
    %v381 = vunpack.c.l.b16 %v98
    %v382 = vunpack.c.l.b16 %v99
    %v383 = vunpack.c.l.b16 %v100
    %v384 = vunpack.c.l.b16 %v101
    %v385 = vunpack.c.l.b16 %v102
    %v386 = vunpack.c.l.b16 %v103
    %v387 = vunpack.c.l.b16 %v104
    %v388 = vunpack.c.l.b16 %v105
    %v389 = vunpack.c.l.b16 %v106
    %v390 = vunpack.c.l.b16 %v107
    %v391 = vunpack.c.l.b16 %v108
    %v392 = vunpack.c.l.b16 %v109
    %v393 = vunpack.c.l.b16 %v110
    %v394 = vunpack.c.l.b16 %v111
    %v395 = vunpack.c.l.b16 %v112
    %v396 = vunpack.c.l.b16 %v113
    %v397 = vunpack.c.l.b16 %v114
    %v398 = vunpack.c.l.b16 %v115
    %v399 = vunpack.c.l.b16 %v116
    %v400 = vunpack.c.l.b16 %v117
    %v401 = vunpack.c.l.b16 %v118
    %v402 = vunpack.c.l.b16 %v119
    %v403 = vunpack.c.l.b16 %v120
    %v404 = vunpack.c.l.b16 %v121
    %v405 = vunpack.c.l.b16 %v122
    %v406 = vunpack.c.l.b16 %v123
    %v407 = vunpack.c.l.b16 %v124
    %v408 = vunpack.c.l.b16 %v125
    %v409 = vunpack.c.l.b16 %v126
    %v410 = vunpack.c.l.b16 %v127
    %v411 = vunpack.c.l.b16 %v128
    %v412 = vunpack.c.l.b16 %v129
    %v413 = vunpack.c.l.b16 %v130
    %v414 = vunpack.c.l.b16 %v131
    %v415 = vunpack.c.l.b16 %v132
    %v416 = vunpack.c.l.b16 %v133
    %v417 = vunpack.c.l.b16 %v134
    %v418 = vunpack.c.l.b16 %v135
    %v419 = vunpack.c.l.b16 %v136
    %v420 = vunpack.c.l.b16 %v137
    %v421 = vunpack.c.l.b16 %v138
    %v422 = vunpack.c.l.b16 %v139
    %v423 = vunpack.c.l.b16 %v140
    %v424 = vunpack.c.l.b16 %v141
    %v425 = vunpack.c.l.b16 %v142
    %v426 = vunpack.c.l.b16 %v143
    %v427 = vunpack.c.l.b16 %v144
    %v428 = vunpack.c.l.b16 %v145
    %v429 = vunpack.c.l.b16 %v146
    %v430 = vunpack.c.l.b16 %v147
    %v431 = vunpack.c.l.b16 %v148
    %v432 = vunpack.c.l.b16 %v149
    %v433 = vunpack.c.l.b16 %v150
    %v434 = vunpack.c.l.b16 %v151
    %v435 = vunpack.c.l.b16 %v152
    %v436 = vunpack.c.l.b16 %v153
    %v437 = vunpack.c.l.b16 %v154
    %v438 = vunpack.c.l.b16 %v155
    %v439 = vunpack.c.l.b16 %v156
    %v440 = vunpack.c.l.b16 %v157
    %v441 = vunpack.c.l.b16 %v158
    %v442 = vunpack.c.l.b16 %v159
    %v443 = vunpack.c.l.b16 %v160
    %v444 = vunpack.c.l.b16 %v161
    %v445 = vunpack.c.l.b16 %v162
    %v446 = vunpack.c.l.b16 %v163
    %v447 = vunpack.c.l.b16 %v164
    %v448 = vunpack.c.l.b16 %v165
    %v449 = vunpack.c.l.b16 %v166
    %v450 = vunpack.c.l.b16 %v167
    %v451 = vunpack.c.l.b16 %v168
    %v452 = vunpack.c.l.b16 %v169
    %v453 = vunpack.c.l.b16 %v170
    %v454 = vunpack.c.l.b16 %v171
    %v455 = vunpack.c.l.b16 %v172
    %v456 = vunpack.c.l.b16 %v173
    %v457 = vunpack.c.l.b16 %v174
    %v458 = vunpack.c.l.b16 %v175
    %v459 = vunpack.c.l.b16 %v176
    %v460 = vunpack.c.l.b16 %v177
    %v461 = vunpack.c.l.b16 %v178
    %v462 = vunpack.c.l.b16 %v179
    %v463 = vunpack.c.l.b16 %v180
    %v464 = vunpack.c.l.b16 %v181
    %v465 = vunpack.c.l.b16 %v182
    %v466 = vunpack.c.l.b16 %v183
    %v467 = vunpack.c.l.b16 %v184
    %v468 = vunpack.c.l.b16 %v185
    %v469 = vunpack.c.l.b16 %v186
    %v470 = vunpack.c.l.b16 %v187
    %v471 = vunpack.c.l.b16 %v188
    %v472 = vunpack.c.l.b16 %v189
    %v473 = vunpack.c.l.b16 %v190
    %v474 = vunpack.c.l.b16 %v191
    %v475 = vunpack.c.l.b16 %v192
    %v476 = vunpack.c.l.b16 %v193
    %v477 = vunpack.c.l.b16 %v194
    %v478 = vunpack.c.l.b16 %v195
    %v479 = vunpack.c.l.b16 %v196
    %v480 = vunpack.c.l.b16 %v197
    %v481 = vunpack.c.l.b16 %v198
    %v482 = vunpack.c.l.b16 %v199
    %v483 = vunpack.c.l.b16 %v200
    %v484 = vunpack.c.l.b16 %v201
    %v485 = vunpack.c.l.b16 %v202
    %v486 = vunpack.c.l.b16 %v203
    %v487 = vunpack.c.l.b16 %v204
    %v488 = vunpack.c.l.b16 %v205
    %v489 = vpack.c.b16 %v362, %v361
    %v490 = vpack.c.b16 %v364, %v363
    %v491 = vpack.c.b16 %v366, %v365
    %v492 = vpack.c.b16 %v368, %v367
    %v493 = vpack.c.b16 %v370, %v369
    %v494 = vpack.c.b16 %v372, %v371
    %v495 = vpack.c.b16 %v374, %v373
    %v496 = vpack.c.b16 %v376, %v375
    %v497 = vpack.c.b16 %v378, %v377
    %v498 = vpack.c.b16 %v380, %v379
    %v499 = vpack.c.b16 %v382, %v381
    %v500 = vpack.c.b16 %v384, %v383
    %v501 = vpack.c.b16 %v386, %v385
    %v502 = vpack.c.b16 %v388, %v387
    %v503 = vpack.c.b16 %v390, %v389
    %v504 = vpack.c.b16 %v392, %v391
    %v505 = vpack.c.b16 %v394, %v393
    %v506 = vpack.c.b16 %v396, %v395
    %v507 = vpack.c.b16 %v398, %v397
    %v508 = vpack.c.b16 %v400, %v399
    %v509 = vpack.c.b16 %v402, %v401
    %v510 = vpack.c.b16 %v404, %v403
    %v511 = vpack.c.b16 %v406, %v405
    %v512 = vpack.c.b16 %v408, %v407
    %v513 = vpack.c.b16 %v410, %v409
    %v514 = vpack.c.b16 %v412, %v411
    %v515 = vpack.c.b16 %v414, %v413
    %v516 = vpack.c.b16 %v416, %v415
    %v517 = vpack.c.b16 %v418, %v417
    %v518 = vpack.c.b16 %v420, %v419
    %v519 = vpack.c.b16 %v422, %v421
    %v520 = vpack.c.b16 %v424, %v423
    %v521 = vpack.c.b16 %v426, %v425
    %v522 = vpack.c.b16 %v428, %v427
    %v523 = vpack.c.b16 %v430, %v429
    %v524 = vpack.c.b16 %v432, %v431
    %v525 = vpack.c.b16 %v434, %v433
    %v526 = vpack.c.b16 %v436, %v435
    %v527 = vpack.c.b16 %v438, %v437
    %v528 = vpack.c.b16 %v440, %v439
    %v529 = vpack.c.b16 %v442, %v441
    %v530 = vpack.c.b16 %v444, %v443
    %v531 = vpack.c.b16 %v446, %v445
    %v532 = vpack.c.b16 %v448, %v447
    %v533 = vpack.c.b16 %v450, %v449
    %v534 = vpack.c.b16 %v452, %v451
    %v535 = vpack.c.b16 %v454, %v453
    %v536 = vpack.c.b16 %v456, %v455
    %v537 = vpack.c.b16 %v458, %v457
    %v538 = vpack.c.b16 %v460, %v459
    %v539 = vpack.c.b16 %v462, %v461
    %v540 = vpack.c.b16 %v464, %v463
    %v541 = vpack.c.b16 %v466, %v465
    %v542 = vpack.c.b16 %v468, %v467
    %v543 = vpack.c.b16 %v470, %v469
    %v544 = vpack.c.b16 %v472, %v471
    %v545 = vpack.c.b16 %v474, %v473
    %v546 = vpack.c.b16 %v476, %v475
    %v547 = vpack.c.b16 %v478, %v477
    %v548 = vpack.c.b16 %v480, %v479
    %v549 = vpack.c.b16 %v482, %v481
    %v550 = vpack.c.b16 %v484, %v483
    %v551 = vpack.c.b16 %v486, %v485
    %v552 = vpack.c.b16 %v488, %v487
    %617 = vmatpush.bf16.msra.mxu0 %v496
    %618 = vmatpush.bf16.msra.mxu0 %v495
    %619 = vmatpush.bf16.msra.mxu0 %v494
    %620 = vmatpush.bf16.msra.mxu0 %v493
    %621 = vmatpush.bf16.msra.mxu0 %v492
    %622 = vmatpush.bf16.msra.mxu0 %v491
    %623 = vmatpush.bf16.msra.mxu0 %v490
    %624 = vmatpush.bf16.msra.mxu0 %v489
    %625 = vmatmul.bf16.gmra.mxu0 %v217
    %v626 = vpop.f32.mrf.mxu0
    %v627 = vadd.f32 0.0, %v626
    %v628 = vpop.f32.mrf.mxu0
    %629 = vdwg.mxu0
    %630 = vmatpush.bf16.msra.mxu0 %v504
    %631 = vmatpush.bf16.msra.mxu0 %v503
    %632 = vmatpush.bf16.msra.mxu0 %v502
    %633 = vmatpush.bf16.msra.mxu0 %v501
    %634 = vmatpush.bf16.msra.mxu0 %v500
    %635 = vmatpush.bf16.msra.mxu0 %v499
    %636 = vmatpush.bf16.msra.mxu0 %v498
    %637 = vmatpush.bf16.msra.mxu0 %v497
    %638 = vmatmul.bf16.gmra.mxu0 %v218
    %v639 = vpop.f32.mrf.mxu0
    %v640 = vadd.f32 %v627, %v639
    %v641 = vpop.f32.mrf.mxu0
    %642 = vdwg.mxu0
    %643 = vmatpush.bf16.msra.mxu0 %v512
    %644 = vmatpush.bf16.msra.mxu0 %v511
    %645 = vmatpush.bf16.msra.mxu0 %v510
    %646 = vmatpush.bf16.msra.mxu0 %v509
    %647 = vmatpush.bf16.msra.mxu0 %v508
    %648 = vmatpush.bf16.msra.mxu0 %v507
    %649 = vmatpush.bf16.msra.mxu0 %v506
    %650 = vmatpush.bf16.msra.mxu0 %v505
    %651 = vmatmul.bf16.gmra.mxu0 %v219
    %v652 = vpop.f32.mrf.mxu0
    %v653 = vadd.f32 %v640, %v652
    %v654 = vpop.f32.mrf.mxu0
    %655 = vdwg.mxu0
    %656 = vmatpush.bf16.msra.mxu0 %v520
    %657 = vmatpush.bf16.msra.mxu0 %v519
    %658 = vmatpush.bf16.msra.mxu0 %v518
    %659 = vmatpush.bf16.msra.mxu0 %v517
    %660 = vmatpush.bf16.msra.mxu0 %v516
    %661 = vmatpush.bf16.msra.mxu0 %v515
    %662 = vmatpush.bf16.msra.mxu0 %v514
    %663 = vmatpush.bf16.msra.mxu0 %v513
    %664 = vmatmul.bf16.gmra.mxu0 %v220
    %v665 = vpop.f32.mrf.mxu0
    %v666 = vadd.f32 %v653, %v665
    %v667 = vpop.f32.mrf.mxu0
    %668 = vdwg.mxu0
    %669 = vmatpush.bf16.msra.mxu0 %v528
    %670 = vmatpush.bf16.msra.mxu0 %v527
    %671 = vmatpush.bf16.msra.mxu0 %v526
    %672 = vmatpush.bf16.msra.mxu0 %v525
    %673 = vmatpush.bf16.msra.mxu0 %v524
    %674 = vmatpush.bf16.msra.mxu0 %v523
    %675 = vmatpush.bf16.msra.mxu0 %v522
    %676 = vmatpush.bf16.msra.mxu0 %v521
    %677 = vmatmul.bf16.gmra.mxu0 %v221
    %v678 = vpop.f32.mrf.mxu0
    %v679 = vadd.f32 %v666, %v678
    %v680 = vpop.f32.mrf.mxu0
    %681 = vdwg.mxu0
    %682 = vmatpush.bf16.msra.mxu0 %v536
    %683 = vmatpush.bf16.msra.mxu0 %v535
    %684 = vmatpush.bf16.msra.mxu0 %v534
    %685 = vmatpush.bf16.msra.mxu0 %v533
    %686 = vmatpush.bf16.msra.mxu0 %v532
    %687 = vmatpush.bf16.msra.mxu0 %v531
    %688 = vmatpush.bf16.msra.mxu0 %v530
    %689 = vmatpush.bf16.msra.mxu0 %v529
    %690 = vmatmul.bf16.gmra.mxu0 %v222
    %v691 = vpop.f32.mrf.mxu0
    %v692 = vadd.f32 %v679, %v691
    %v693 = vpop.f32.mrf.mxu0
    %694 = vdwg.mxu0
    %695 = vmatpush.bf16.msra.mxu0 %v544
    %696 = vmatpush.bf16.msra.mxu0 %v543
    %697 = vmatpush.bf16.msra.mxu0 %v542
    %698 = vmatpush.bf16.msra.mxu0 %v541
    %699 = vmatpush.bf16.msra.mxu0 %v540
    %700 = vmatpush.bf16.msra.mxu0 %v539
    %701 = vmatpush.bf16.msra.mxu0 %v538
    %702 = vmatpush.bf16.msra.mxu0 %v537
    %703 = vmatmul.bf16.gmra.mxu0 %v223
    %v704 = vpop.f32.mrf.mxu0
    %v705 = vadd.f32 %v692, %v704
    %v706 = vpop.f32.mrf.mxu0
    %707 = vdwg.mxu0
    %708 = vmatpush.bf16.msra.mxu0 %v552
    %709 = vmatpush.bf16.msra.mxu0 %v551
    %710 = vmatpush.bf16.msra.mxu0 %v550
    %711 = vmatpush.bf16.msra.mxu0 %v549
    %712 = vmatpush.bf16.msra.mxu0 %v548
    %713 = vmatpush.bf16.msra.mxu0 %v547
    %714 = vmatpush.bf16.msra.mxu0 %v546
    %715 = vmatpush.bf16.msra.mxu0 %v545
    %716 = vmatmul.bf16.gmra.mxu0 %v224
    %v717 = vpop.f32.mrf.mxu0
    %v718 = vadd.f32 %v705, %v717
    %v719 = vpop.f32.mrf.mxu0
    %720 = vdwg.mxu0
    %v721 = vadd.f32 %v73, %v718
    %722 = vst [vmem:[#allocation2] sm:$0xff] %v721
    // Predicated region
    $region38: #{tpu_custom_call.1} parent=1 // pred_check
      %p723 = pneg %p68
    $region39: #{tpu_custom_call.1} parent=1 // pred_check_branch
      %725 = sbr.rel (%p723) target = $region41
    $region40: #{tpu_custom_call.1} parent=1 // pred_region
      %v726 = vld [vmem:[#allocation2] sm:$0xff]
      %v727 = vld [vmem:[%s2] sm:$0x1]
      %v729 = vperm.slane %v727, 0
      %v731 = vadd.f32 %v726, %v729
      %v732 = vmax.f32 %v731, 0.0
      %v733 = vpack.c.bf16 %v732, %v732
      %v734 = vld [vmem:[#allocation8] sm:$0xf]
      %v735 = vld [vmem:[#allocation8 + $0x4] sm:$0xf]
      %v736 = vld [vmem:[#allocation8 + $0x8] sm:$0xf]
      %v737 = vld [vmem:[#allocation8 + $0xc] sm:$0xf]
      %v738 = vld [vmem:[#allocation8 + $0x10] sm:$0xf]
      %v739 = vld [vmem:[#allocation8 + $0x14] sm:$0xf]
      %v740 = vld [vmem:[#allocation8 + $0x18] sm:$0xf]
      %v741 = vld [vmem:[#allocation8 + $0x1c] sm:$0xf]
      %v742 = vld [vmem:[#allocation8 + $0x20] sm:$0xf]
      %v743 = vld [vmem:[#allocation8 + $0x24] sm:$0xf]
      %v744 = vld [vmem:[#allocation8 + $0x28] sm:$0xf]
      %v745 = vld [vmem:[#allocation8 + $0x2c] sm:$0xf]
      %v746 = vld [vmem:[#allocation8 + $0x30] sm:$0xf]
      %v747 = vld [vmem:[#allocation8 + $0x34] sm:$0xf]
      %v748 = vld [vmem:[#allocation8 + $0x38] sm:$0xf]
      %v749 = vld [vmem:[#allocation8 + $0x3c] sm:$0xf]
      %v750 = vld [vmem:[%s4] sm:$0x1]
      %v752 = vperm.slane %v750, 0
      %v770 = vunpack.c.l.b16 %v734
      %v771 = vunpack.c.l.b16 %v735
      %v772 = vunpack.c.l.b16 %v736
      %v773 = vunpack.c.l.b16 %v737
      %v774 = vunpack.c.l.b16 %v738
      %v775 = vunpack.c.l.b16 %v739
      %v776 = vunpack.c.l.b16 %v740
      %v777 = vunpack.c.l.b16 %v741
      %v778 = vunpack.c.l.b16 %v742
      %v779 = vunpack.c.l.b16 %v743
      %v780 = vunpack.c.l.b16 %v744
      %v781 = vunpack.c.l.b16 %v745
      %v782 = vunpack.c.l.b16 %v746
      %v783 = vunpack.c.l.b16 %v747
      %v784 = vunpack.c.l.b16 %v748
      %v785 = vunpack.c.l.b16 %v749
      %v786 = vpack.c.b16 %v771, %v770
      %v787 = vpack.c.b16 %v773, %v772
      %v788 = vpack.c.b16 %v775, %v774
      %v789 = vpack.c.b16 %v777, %v776
      %v790 = vpack.c.b16 %v779, %v778
      %v791 = vpack.c.b16 %v781, %v780
      %v792 = vpack.c.b16 %v783, %v782
      %v793 = vpack.c.b16 %v785, %v784
      %802 = vmatpush.bf16.msra.mxu0 %v793
      %803 = vmatpush.bf16.msra.mxu0 %v792
      %804 = vmatpush.bf16.msra.mxu0 %v791
      %805 = vmatpush.bf16.msra.mxu0 %v790
      %806 = vmatpush.bf16.msra.mxu0 %v789
      %807 = vmatpush.bf16.msra.mxu0 %v788
      %808 = vmatpush.bf16.msra.mxu0 %v787
      %809 = vmatpush.bf16.msra.mxu0 %v786
      %810 = vmatmul.bf16.gmra.mxu0 %v733
      %v811 = vpop.f32.mrf.mxu0
      %v812 = vadd.f32 %v752, %v811
      %v813 = vpop.f32.mrf.mxu0
      %814 = vdwg.mxu0
      %815 = vst [vmem:[#allocation9] sm:$0xff] %v812
    $region41: #{tpu_custom_call.1} parent=1 // pred_fallthru
      _
    // Predicated region
    $region42: #{tpu_custom_call.1} parent=1 // pred_check
      _
    $region43: #{tpu_custom_call.1} parent=1 // pred_check_branch
      %817 = sbr.rel (0) target = $region45
    $region44: #{tpu_custom_call.1} parent=1 // pred_region
      %819 = vsyncadd [#allocation5], 96
      %s820 = sshll.u32 [#allocation9], 4
      %s821 = int_to_ptr.vmem [resolvable:$true] %s820
      %s822 = sshll.u32 %s5, 4
      %s823 = int_to_ptr.hbm [resolvable:$true] %s822
      %828 = dma.vmem_to_hbm [thread:$0]  %s821, 32, %s823, [#allocation5], 32, 32, 2
    $region45: #{tpu_custom_call.1} parent=1 // pred_fallthru
      _
    // Predicated region
    $region46: #{tpu_custom_call.1} parent=1 // pred_check
      _
    $region47: #{tpu_custom_call.1} parent=1 // pred_check_branch
      %830 = sbr.rel (0) target = $region49
    $region48: #{tpu_custom_call.1} parent=1 // pred_region
      %832 = dma.done [#allocation5], 128
    $region49: #{tpu_custom_call.1} parent=1 // pred_fallthru
      _
    %833 = vsyncpa [#allocation4], 1
    %834 = vsyncpa [#allocation7], 1
    %835 = vsyncpa [#allocation5], 1

</llo_original>
